<compile_context>
chip_gen: v7x
topology: tpu7x:2x2x1
jax: 0.10.0
libtpu: 0.0.40
codegen_flags: <defaults>
</compile_context>

<pallas_src>
import jax
import jax.numpy as jnp
from jax.experimental import pallas as pl
from jax.experimental.pallas import tpu as pltpu

# ---- config (mirrors `args`) -------------------------------------------------
NUM_FEATS = 32                      # args.num_feats
HIDDEN = 32                         # args.gnn_dim_hidden
OUT_DIM = 16                        # number of classes
GNN_NUM_LAYERS = 2
NUM_HOPS = GNN_NUM_LAYERS + 1       # = 3
EMB_FEATS = (NUM_HOPS - 1) * NUM_FEATS   # = 64 (features carried by x_emb)
HID_CAT = NUM_HOPS * HIDDEN              # = 96 (concatenated hidden width)

TM_CAP = 8192          # per review: larger tiles amortize per-step overhead;
                       # at tm=8192 the double-buffered I/O + bf16 hidden state
                       # stay well under the 16 MiB scoped VMEM floor (v5e).
MIN_GRID_STEPS = 8     # >= 4 steps per TensorCore on v7x megacore.


def _round_up(x, m):
    return ((x + m - 1) // m) * m


def _pick_tm(n, cap=TM_CAP):
    """Row tile: as large as possible up to `cap` while keeping >= 8 grid steps."""
    tm = min(cap, _round_up(pl.cdiv(n, MIN_GRID_STEPS), 8))
    return max(8, tm)


def sign_kernel(x0_ref, xe_ref, w0_ref, we_ref, bc_ref, wp_ref, bp_ref,
                alpha_ref, out_ref):
    """One row-tile of nodes: fused hop linears -> PReLU -> projection."""
    # Inception feed-forwards as block-diagonal bf16 matmuls, f32 accumulation.
    h = jnp.dot(x0_ref[...], w0_ref[...], preferred_element_type=jnp.float32)
    h = h + jnp.dot(xe_ref[...], we_ref[...], preferred_element_type=jnp.float32)
    h = h + bc_ref[...]                       # single (1, 96) f32 bias broadcast

    # PReLU with the learnable scalar alpha (read from SMEM), in f32.
    alpha = alpha_ref[0]
    h = jnp.where(h > 0.0, h, alpha * h)
    # TODO(synk): dropout omitted (inference-mode identity).

    # Final projection: explicit bf16 x bf16 -> f32 (single native MXU pass,
    # and halves the compiler-materialized VMEM intermediate for `h`).
    out = jnp.dot(h.astype(jnp.bfloat16), wp_ref[...],
                  preferred_element_type=jnp.float32)
    out = out + bp_ref[...]
    out_ref[...] = out.astype(out_ref.dtype)


def pack_params(params):
    """One-time host-side packing of the module parameters for the kernel.

    Returns (w0_pad_bf16, we_bd_bf16, b_cat_f32, w_proj_bf16, b_proj_f32, alpha_f32)
      w0_pad : (NUM_FEATS, HID_CAT)   hop-0 weight in columns [0:HIDDEN], rest 0
      we_bd  : (EMB_FEATS, HID_CAT)   block-diagonal weights for hops 1..NUM_HOPS-1
    """
    w_hop, b_hop, alpha, w_proj, b_proj = params
    w0_pad = jnp.zeros((NUM_FEATS, HID_CAT), jnp.float32).at[:, :HIDDEN].set(w_hop[0])
    we_bd = jnp.zeros((EMB_FEATS, HID_CAT), jnp.float32)
    for h in range(1, NUM_HOPS):
        we_bd = we_bd.at[(h - 1) * NUM_FEATS:h * NUM_FEATS,
                         h * HIDDEN:(h + 1) * HIDDEN].set(w_hop[h])
    b_cat = b_hop.reshape(1, HID_CAT).astype(jnp.float32)
    return (w0_pad.astype(jnp.bfloat16), we_bd.astype(jnp.bfloat16),
            b_cat,
            w_proj.astype(jnp.bfloat16), b_proj.astype(jnp.float32),
            alpha.reshape((1,)).astype(jnp.float32))


def sign_forward(x0, x_emb, packed_params, *, tm=None, out_dtype=jnp.float32):
    """SIGN forward.  x0: [N, NUM_FEATS] bf16, x_emb: [N, EMB_FEATS] bf16."""
    n = x0.shape[0]
    assert x0.shape == (n, NUM_FEATS)
    assert x_emb.shape == (n, EMB_FEATS)
    w0_pad, we_bd, b_cat, w_proj, b_proj, alpha = packed_params

    if tm is None:
        tm = _pick_tm(n)
    grid = (pl.cdiv(n, tm),)   # ragged last tile handled by Pallas block padding

    return pl.pallas_call(
        sign_kernel,
        out_shape=jax.ShapeDtypeStruct((n, OUT_DIM), out_dtype),
        grid_spec=pltpu.PrefetchScalarGridSpec(
            num_scalar_prefetch=0,
            grid=grid,
            in_specs=[
                pl.BlockSpec((tm, NUM_FEATS), lambda i: (i, 0)),        # x0 tile (bf16)
                pl.BlockSpec((tm, EMB_FEATS), lambda i: (i, 0)),        # x_emb tile (bf16)
                pl.BlockSpec((NUM_FEATS, HID_CAT), lambda i: (0, 0)),   # hop-0 weight (padded, bf16)
                pl.BlockSpec((EMB_FEATS, HID_CAT), lambda i: (0, 0)),   # hops 1.. block-diag weight (bf16)
                pl.BlockSpec((1, HID_CAT), lambda i: (0, 0)),           # concatenated hop bias (f32)
                pl.BlockSpec((HID_CAT, OUT_DIM), lambda i: (0, 0)),     # projection weight (bf16)
                pl.BlockSpec((1, OUT_DIM), lambda i: (0, 0)),           # projection bias (f32)
                pl.BlockSpec(memory_space=pltpu.MemorySpace.SMEM),      # PReLU alpha scalar
            ],
            out_specs=pl.BlockSpec((tm, OUT_DIM), lambda i: (i, 0)),
        ),
        compiler_params=pltpu.CompilerParams(dimension_semantics=("parallel",)),
    )(x0, x_emb, w0_pad, we_bd, b_cat, w_proj, b_proj, alpha)


def sign_reference(x0, x_emb, params, out_dtype=jnp.float32):
    """Pure-JAX reference mirroring the kernel's bf16 feed + f32 accumulation."""
    w_hop, b_hop, alpha, w_proj, b_proj = params
    xs = jnp.concatenate([x0, x_emb], axis=-1).astype(jnp.float32)
    w_hop_q = w_hop.astype(jnp.bfloat16).astype(jnp.float32)
    hs = []
    for h in range(NUM_HOPS):
        x_h = xs[:, h * NUM_FEATS:(h + 1) * NUM_FEATS]
        hs.append(jnp.dot(x_h, w_hop_q[h], precision=jax.lax.Precision.HIGHEST)
                  + b_hop[h])
    hcat = jnp.concatenate(hs, axis=-1)
    hcat = jnp.where(hcat > 0, hcat, alpha.reshape(())[()] * hcat)
    hcat_q = hcat.astype(jnp.bfloat16).astype(jnp.float32)
    w_proj_q = w_proj.astype(jnp.bfloat16).astype(jnp.float32)
    out = jnp.dot(hcat_q, w_proj_q, precision=jax.lax.Precision.HIGHEST) + b_proj
    return out.astype(out_dtype)


def init_params(key):
    k0, k1, k2, k3 = jax.random.split(key, 4)
    w_hop = 0.1 * jax.random.normal(k0, (NUM_HOPS, NUM_FEATS, HIDDEN), jnp.float32)
    b_hop = 0.1 * jax.random.normal(k1, (NUM_HOPS, HIDDEN), jnp.float32)
    alpha = jnp.full((1,), 0.25, jnp.float32)      # nn.PReLU default init (learnable)
    w_proj = 0.1 * jax.random.normal(k2, (HID_CAT, OUT_DIM), jnp.float32)
    b_proj = 0.1 * jax.random.normal(k3, (1, OUT_DIM), jnp.float32)
    return w_hop, b_hop, alpha, w_proj, b_proj


if __name__ == "__main__":
    N = 256
    key = jax.random.PRNGKey(0)
    kx0, kxe, kp = jax.random.split(key, 3)

    # x0: hop-0 node features; x_emb: features of the remaining hops.
    # Fed as bf16 (halves the dominant HBM read traffic of this mem-bound op).
    x0 = jax.random.normal(kx0, (N, NUM_FEATS), jnp.float32).astype(jnp.bfloat16)
    x_emb = jax.random.normal(kxe, (N, EMB_FEATS), jnp.float32).astype(jnp.bfloat16)

    params = init_params(kp)
    packed = pack_params(params)    # one-time weight packing (block-diagonal, bf16)

    # f32 output (matches the PyTorch module's dtype semantics).
    out = sign_forward(x0, x_emb, packed, out_dtype=jnp.float32)
    out = jax.block_until_ready(out)
    ref = sign_reference(x0, x_emb, params, out_dtype=jnp.float32)
    assert out.shape == (N, OUT_DIM)
    assert jnp.allclose(out, ref, atol=1e-3, rtol=1e-3), float(jnp.abs(out - ref).max())

    # bf16 output variant (review: ~12.5% HBM-byte saving when downstream allows).
    out_bf16 = jax.block_until_ready(
        sign_forward(x0, x_emb, packed, out_dtype=jnp.bfloat16))
    ref_bf16 = sign_reference(x0, x_emb, params, out_dtype=jnp.bfloat16)
    assert jnp.allclose(out_bf16.astype(jnp.float32), ref_bf16.astype(jnp.float32),
                        atol=2e-2, rtol=2e-2)

    print("KERNEL_OK")
</pallas_src>

<mosaic_0001>
module attributes {stable_mosaic.version = 11 : i64} {
  func.func @sign_kernel(%arg0: i32, %arg1: memref<32x32xbf16, #tpu.memory_space<vmem>>, %arg2: memref<32x64xbf16, #tpu.memory_space<vmem>>, %arg3: memref<32x96xbf16, #tpu.memory_space<vmem>>, %arg4: memref<64x96xbf16, #tpu.memory_space<vmem>>, %arg5: memref<1x96xf32, #tpu.memory_space<vmem>>, %arg6: memref<96x16xbf16, #tpu.memory_space<vmem>>, %arg7: memref<1x16xf32, #tpu.memory_space<vmem>>, %arg8: memref<1xf32, #tpu.memory_space<smem>>, %arg9: memref<32x16xf32, #tpu.memory_space<vmem>>) attributes {dimension_semantics = [#tpu.dimension_semantics<parallel>], iteration_bounds = array<i64: 8>, scalar_prefetch = 0 : i64, scratch_operands = 0 : i64, tpu.core_type = #tpu.core_type<tc>, window_params = [{transform_indices = @transform_0, window_bounds = array<i64: 32, 32>}, {transform_indices = @transform_1, window_bounds = array<i64: 32, 64>}, {pipeline_mode = #tpu.pipeline_mode<synchronous>, transform_indices = @transform_2, window_bounds = array<i64: 32, 96>}, {pipeline_mode = #tpu.pipeline_mode<synchronous>, transform_indices = @transform_3, window_bounds = array<i64: 64, 96>}, {pipeline_mode = #tpu.pipeline_mode<synchronous>, transform_indices = @transform_4, window_bounds = array<i64: 1, 96>}, {pipeline_mode = #tpu.pipeline_mode<synchronous>, transform_indices = @transform_5, window_bounds = array<i64: 96, 16>}, {pipeline_mode = #tpu.pipeline_mode<synchronous>, transform_indices = @transform_6, window_bounds = array<i64: 1, 16>}, {transform_indices = @transform_7, window_bounds = array<i64: 1>}, {transform_indices = @transform_8, window_bounds = array<i64: 32, 16>}]} {
    %c0 = arith.constant 0 : index
    %c0_0 = arith.constant 0 : index
    %0 = vector.load %arg1[%c0, %c0_0] : memref<32x32xbf16, #tpu.memory_space<vmem>>, vector<32x32xbf16>
    %c0_1 = arith.constant 0 : index
    %c0_2 = arith.constant 0 : index
    %1 = vector.load %arg3[%c0_1, %c0_2] : memref<32x96xbf16, #tpu.memory_space<vmem>>, vector<32x96xbf16>
    %cst = arith.constant dense<0.000000e+00> : vector<32x96xf32>
    %2 = tpu.matmul %0, %1, %cst {dimension_numbers = #tpu.dot_dimension_numbers<[1], [0], [0], [1], [0, 0, 1, 1], [], []>} : vector<32x32xbf16>, vector<32x96xbf16>, vector<32x96xf32> -> vector<32x96xf32>
    %c0_3 = arith.constant 0 : index
    %c0_4 = arith.constant 0 : index
    %3 = vector.load %arg2[%c0_3, %c0_4] : memref<32x64xbf16, #tpu.memory_space<vmem>>, vector<32x64xbf16>
    %c0_5 = arith.constant 0 : index
    %c0_6 = arith.constant 0 : index
    %4 = vector.load %arg4[%c0_5, %c0_6] : memref<64x96xbf16, #tpu.memory_space<vmem>>, vector<64x96xbf16>
    %cst_7 = arith.constant dense<0.000000e+00> : vector<32x96xf32>
    %5 = tpu.matmul %3, %4, %cst_7 {dimension_numbers = #tpu.dot_dimension_numbers<[1], [0], [0], [1], [0, 0, 1, 1], [], []>} : vector<32x64xbf16>, vector<64x96xbf16>, vector<32x96xf32> -> vector<32x96xf32>
    %6 = arith.addf %2, %5 : vector<32x96xf32>
    %c0_8 = arith.constant 0 : index
    %c0_9 = arith.constant 0 : index
    %7 = vector.load %arg5[%c0_8, %c0_9] : memref<1x96xf32, #tpu.memory_space<vmem>>, vector<1x96xf32>
    %8 = vector.broadcast %7 : vector<1x96xf32> to vector<32x96xf32>
    %9 = arith.addf %6, %8 : vector<32x96xf32>
    %c0_10 = arith.constant 0 : index
    %10 = memref.load %arg8[%c0_10] : memref<1xf32, #tpu.memory_space<smem>>
    %cst_11 = arith.constant 0.000000e+00 : f32
    %11 = vector.broadcast %cst_11 : f32 to vector<32x96xf32>
    %12 = arith.cmpf ogt, %9, %11 : vector<32x96xf32>
    %13 = vector.broadcast %10 : f32 to vector<32x96xf32>
    %14 = arith.mulf %13, %9 : vector<32x96xf32>
    %15 = arith.select %12, %9, %14 : vector<32x96xi1>, vector<32x96xf32>
    %16 = arith.truncf %15 : vector<32x96xf32> to vector<32x96xbf16>
    %c0_12 = arith.constant 0 : index
    %c0_13 = arith.constant 0 : index
    %17 = vector.load %arg6[%c0_12, %c0_13] : memref<96x16xbf16, #tpu.memory_space<vmem>>, vector<96x16xbf16>
    %cst_14 = arith.constant dense<0.000000e+00> : vector<32x16xf32>
    %18 = tpu.matmul %16, %17, %cst_14 {dimension_numbers = #tpu.dot_dimension_numbers<[1], [0], [0], [1], [0, 0, 1, 1], [], []>} : vector<32x96xbf16>, vector<96x16xbf16>, vector<32x16xf32> -> vector<32x16xf32>
    %c0_15 = arith.constant 0 : index
    %c0_16 = arith.constant 0 : index
    %19 = vector.load %arg7[%c0_15, %c0_16] : memref<1x16xf32, #tpu.memory_space<vmem>>, vector<1x16xf32>
    %20 = vector.broadcast %19 : vector<1x16xf32> to vector<32x16xf32>
    %21 = arith.addf %18, %20 : vector<32x16xf32>
    %c0_17 = arith.constant 0 : index
    %c0_18 = arith.constant 0 : index
    %22 = vector.load %arg9[%c0_17, %c0_18] : memref<32x16xf32, #tpu.memory_space<vmem>>, vector<32x16xf32>
    tpu.vector_store %arg9[%c0_17, %c0_18], %21 {strides = array<i32>} : memref<32x16xf32, #tpu.memory_space<vmem>>, vector<32x16xf32>,
    return
  }
  func.func @transform_0(%arg0: i32) -> (i32, i32) {
    %c0_i32 = arith.constant 0 : i32
    %c0_i32_0 = arith.constant 0 : i32
    return %arg0, %c0_i32 : i32, i32
  }
  func.func @transform_1(%arg0: i32) -> (i32, i32) {
    %c0_i32 = arith.constant 0 : i32
    %c0_i32_0 = arith.constant 0 : i32
    return %arg0, %c0_i32 : i32, i32
  }
  func.func @transform_2(%arg0: i32) -> (i32, i32) {
    %c0_i32 = arith.constant 0 : i32
    %c0_i32_0 = arith.constant 0 : i32
    %c0_i32_1 = arith.constant 0 : i32
    return %c0_i32, %c0_i32_0 : i32, i32
  }
  func.func @transform_3(%arg0: i32) -> (i32, i32) {
    %c0_i32 = arith.constant 0 : i32
    %c0_i32_0 = arith.constant 0 : i32
    %c0_i32_1 = arith.constant 0 : i32
    return %c0_i32, %c0_i32_0 : i32, i32
  }
  func.func @transform_4(%arg0: i32) -> (i32, i32) {
    %c0_i32 = arith.constant 0 : i32
    %c0_i32_0 = arith.constant 0 : i32
    %c0_i32_1 = arith.constant 0 : i32
    return %c0_i32, %c0_i32_0 : i32, i32
  }
  func.func @transform_5(%arg0: i32) -> (i32, i32) {
    %c0_i32 = arith.constant 0 : i32
    %c0_i32_0 = arith.constant 0 : i32
    %c0_i32_1 = arith.constant 0 : i32
    return %c0_i32, %c0_i32_0 : i32, i32
  }
  func.func @transform_6(%arg0: i32) -> (i32, i32) {
    %c0_i32 = arith.constant 0 : i32
    %c0_i32_0 = arith.constant 0 : i32
    %c0_i32_1 = arith.constant 0 : i32
    return %c0_i32, %c0_i32_0 : i32, i32
  }
  func.func @transform_7(%arg0: i32) -> i32 {
    %c0_i32 = arith.constant 0 : i32
    %c0_i32_0 = arith.constant 0 : i32
    return %c0_i32 : i32
  }
  func.func @transform_8(%arg0: i32) -> (i32, i32) {
    %c0_i32 = arith.constant 0 : i32
    %c0_i32_0 = arith.constant 0 : i32
    return %arg0, %c0_i32 : i32, i32
  }
}

</mosaic_0001>

<llo_original>
// kernel: tpu_custom_call.1
$region0: #{tpu_custom_call.1}
  #allocation0 [shape = 'u32[]', space=smem, size = 0x4, offset = 0x4, fixed_abs, tag = 'smem constant byte address 0x4 - core index']
  #allocation1 [shape = 'u32[144,128]{1,0:T(1,128)}', space=vmem, size = 0x12000, scoped, tag = 'internal scratch']
  #allocation2 [shape = 'f32[1]{0:T(128)S(6)}', space=smem, size = 0x200, scoped, tag = 'scoped memory for tpu_custom_call.1']
  %s0 = inlined_call_operand.vmem [shape: bf16[256,32], index: 0, kind: input, shape index: {}]
  %s1 = inlined_call_operand.vmem [shape: bf16[256,64], index: 1, kind: input, shape index: {}]
  %s2 = inlined_call_operand.vmem [shape: bf16[32,96], index: 2, kind: input, shape index: {}]
  %s3 = inlined_call_operand.vmem [shape: bf16[64,96], index: 3, kind: input, shape index: {}]
  %s4 = inlined_call_operand.vmem [shape: f32[1,96], index: 4, kind: input, shape index: {}]
  %s5 = inlined_call_operand.vmem [shape: bf16[96,16], index: 5, kind: input, shape index: {}]
  %s6 = inlined_call_operand.vmem [shape: f32[1,16], index: 6, kind: input, shape index: {}]
  %s7 = inlined_call_operand.<no memory space> [shape: f32[1], index: 7, kind: input, shape index: {}]
  %s8 = inlined_call_operand.vmem [shape: f32[256,16], index: 8, kind: output, shape index: {}]
  %s9 = sld [smem:[#allocation0]]
  $region65: #{tpu_custom_call.1} parent=0
    _
  %s11 = ssub.s32 1, %s9
  %s12 = scalar_select 0, %s11, %s9
  %13 = sst [smem:[#allocation2]] %s7
  loop: start=0, step=1, limit=10
  $region2: #{tpu_custom_call.1} parent=0 // loop_pre_header
    _
  $region3: #{tpu_custom_call.1} parent=0 // loop_header
    %s15 = sphi 0, %s19
    %p16 = scmp.ge.s32.totalorder %s15, 10
    %s25 = sphi 0, %s27
    %s28 = sphi 0, %s25
    %s29 = sphi 0, %s28
    %s45 = sphi 0, %s29
    %s51 = sphi 0, %s53
    %s54 = sphi 0, %s51
    %s55 = sphi 0, %s54
    %s71 = sphi 0, %s55
    %s75 = sphi 0, %s75
    %s77 = sphi 0, %s75
    %s78 = sphi 0, %s77
    %s92 = sphi 0, %s78
    %s96 = sphi 0, %s96
    %s98 = sphi 0, %s96
    %s99 = sphi 0, %s98
    %s113 = sphi 0, %s99
    %s117 = sphi 0, %s117
    %s119 = sphi 0, %s117
    %s120 = sphi 0, %s119
    %s134 = sphi 0, %s120
    %s138 = sphi 0, %s138
    %s140 = sphi 0, %s138
    %s141 = sphi 0, %s140
    %s155 = sphi 0, %s141
    %s159 = sphi 0, %s159
    %s161 = sphi 0, %s159
    %s162 = sphi 0, %s161
    %s176 = sphi 0, %s162
    %s180 = sphi 0, %s180
    %s182 = sphi 0, %s180
    %s183 = sphi 0, %s182
    %s197 = sphi 0, %s183
    %s203 = sphi 0, %s205
    %s206 = sphi 0, %s203
    %s207 = sphi 0, %s206
    %s223 = sphi 0, %s207
  $region4: #{tpu_custom_call.1} parent=0 // loop_header_branch
    %18 = sbr.rel (%p16) target = $region8
  $region5: #{tpu_custom_call.1} parent=0 // loop_body
    %s20 = ssub.s32 %s15, 1
    %s21 = ssub.s32 %s15, 2
    %s22 = sadd.s32 %s15, 1
    %s23 = ssub.s32 %s15, %s22
    %p24 = scmp.eq.s32.totalorder %s23, 0
    %s26 = sadd.s32 %s25, 1
    %s27 = scalar_select %p24, %s25, %s26
    %p30 = pneg %p24
    %p31 = scmp.eq.s32.totalorder %s15, 7
    %p32 = por %p30, %p31
    %p33 = scmp.ne.s32.totalorder %s25, %s28
    %p34 = scmp.eq.s32.totalorder %s15, 0
    %p35 = por %p33, %p34
    %p36 = scmp.ne.s32.totalorder %s25, %s28
    %p37 = scmp.eq.s32.totalorder %s20, 7
    %p38 = por %p36, %p37
    %p39 = scmp.ne.s32.totalorder %s28, %s29
    %p40 = scmp.eq.s32.totalorder %s20, 0
    %p41 = por %p39, %p40
    %p42 = scmp.ne.s32.totalorder %s28, %s29
    %p43 = scmp.eq.s32.totalorder %s21, 7
    %p44 = por %p42, %p43
    %p46 = scmp.ne.s32.totalorder %s29, %s45
    %p47 = scmp.eq.s32.totalorder %s21, 0
    %p48 = por %p46, %p47
    %s49 = ssub.s32 %s15, %s22
    %p50 = scmp.eq.s32.totalorder %s49, 0
    %s52 = sadd.s32 %s51, 1
    %s53 = scalar_select %p50, %s51, %s52
    %p56 = pneg %p50
    %p57 = scmp.eq.s32.totalorder %s15, 7
    %p58 = por %p56, %p57
    %p59 = scmp.ne.s32.totalorder %s51, %s54
    %p60 = scmp.eq.s32.totalorder %s15, 0
    %p61 = por %p59, %p60
    %p62 = scmp.ne.s32.totalorder %s51, %s54
    %p63 = scmp.eq.s32.totalorder %s20, 7
    %p64 = por %p62, %p63
    %p65 = scmp.ne.s32.totalorder %s54, %s55
    %p66 = scmp.eq.s32.totalorder %s20, 0
    %p67 = por %p65, %p66
    %p68 = scmp.ne.s32.totalorder %s54, %s55
    %p69 = scmp.eq.s32.totalorder %s21, 7
    %p70 = por %p68, %p69
    %p72 = scmp.ne.s32.totalorder %s55, %s71
    %p73 = scmp.eq.s32.totalorder %s21, 0
    %p74 = por %p72, %p73
    %s76 = sadd.s32 %s75, 1
    %p79 = scmp.eq.s32.totalorder %s15, 7
    %p80 = scmp.ne.s32.totalorder %s75, %s77
    %p81 = scmp.eq.s32.totalorder %s15, 0
    %p82 = por %p80, %p81
    %p83 = scmp.ne.s32.totalorder %s75, %s77
    %p84 = scmp.eq.s32.totalorder %s20, 7
    %p85 = por %p83, %p84
    %p86 = scmp.ne.s32.totalorder %s77, %s78
    %p87 = scmp.eq.s32.totalorder %s20, 0
    %p88 = por %p86, %p87
    %p89 = scmp.ne.s32.totalorder %s77, %s78
    %p90 = scmp.eq.s32.totalorder %s21, 7
    %p91 = por %p89, %p90
    %p93 = scmp.ne.s32.totalorder %s78, %s92
    %p94 = scmp.eq.s32.totalorder %s21, 0
    %p95 = por %p93, %p94
    %s97 = sadd.s32 %s96, 1
    %p100 = scmp.eq.s32.totalorder %s15, 7
    %p101 = scmp.ne.s32.totalorder %s96, %s98
    %p102 = scmp.eq.s32.totalorder %s15, 0
    %p103 = por %p101, %p102
    %p104 = scmp.ne.s32.totalorder %s96, %s98
    %p105 = scmp.eq.s32.totalorder %s20, 7
    %p106 = por %p104, %p105
    %p107 = scmp.ne.s32.totalorder %s98, %s99
    %p108 = scmp.eq.s32.totalorder %s20, 0
    %p109 = por %p107, %p108
    %p110 = scmp.ne.s32.totalorder %s98, %s99
    %p111 = scmp.eq.s32.totalorder %s21, 7
    %p112 = por %p110, %p111
    %p114 = scmp.ne.s32.totalorder %s99, %s113
    %p115 = scmp.eq.s32.totalorder %s21, 0
    %p116 = por %p114, %p115
    %s118 = sadd.s32 %s117, 1
    %p121 = scmp.eq.s32.totalorder %s15, 7
    %p122 = scmp.ne.s32.totalorder %s117, %s119
    %p123 = scmp.eq.s32.totalorder %s15, 0
    %p124 = por %p122, %p123
    %p125 = scmp.ne.s32.totalorder %s117, %s119
    %p126 = scmp.eq.s32.totalorder %s20, 7
    %p127 = por %p125, %p126
    %p128 = scmp.ne.s32.totalorder %s119, %s120
    %p129 = scmp.eq.s32.totalorder %s20, 0
    %p130 = por %p128, %p129
    %p131 = scmp.ne.s32.totalorder %s119, %s120
    %p132 = scmp.eq.s32.totalorder %s21, 7
    %p133 = por %p131, %p132
    %p135 = scmp.ne.s32.totalorder %s120, %s134
    %p136 = scmp.eq.s32.totalorder %s21, 0
    %p137 = por %p135, %p136
    %s139 = sadd.s32 %s138, 1
    %p142 = scmp.eq.s32.totalorder %s15, 7
    %p143 = scmp.ne.s32.totalorder %s138, %s140
    %p144 = scmp.eq.s32.totalorder %s15, 0
    %p145 = por %p143, %p144
    %p146 = scmp.ne.s32.totalorder %s138, %s140
    %p147 = scmp.eq.s32.totalorder %s20, 7
    %p148 = por %p146, %p147
    %p149 = scmp.ne.s32.totalorder %s140, %s141
    %p150 = scmp.eq.s32.totalorder %s20, 0
    %p151 = por %p149, %p150
    %p152 = scmp.ne.s32.totalorder %s140, %s141
    %p153 = scmp.eq.s32.totalorder %s21, 7
    %p154 = por %p152, %p153
    %p156 = scmp.ne.s32.totalorder %s141, %s155
    %p157 = scmp.eq.s32.totalorder %s21, 0
    %p158 = por %p156, %p157
    %s160 = sadd.s32 %s159, 1
    %p163 = scmp.eq.s32.totalorder %s15, 7
    %p164 = scmp.ne.s32.totalorder %s159, %s161
    %p165 = scmp.eq.s32.totalorder %s15, 0
    %p166 = por %p164, %p165
    %p167 = scmp.ne.s32.totalorder %s159, %s161
    %p168 = scmp.eq.s32.totalorder %s20, 7
    %p169 = por %p167, %p168
    %p170 = scmp.ne.s32.totalorder %s161, %s162
    %p171 = scmp.eq.s32.totalorder %s20, 0
    %p172 = por %p170, %p171
    %p173 = scmp.ne.s32.totalorder %s161, %s162
    %p174 = scmp.eq.s32.totalorder %s21, 7
    %p175 = por %p173, %p174
    %p177 = scmp.ne.s32.totalorder %s162, %s176
    %p178 = scmp.eq.s32.totalorder %s21, 0
    %p179 = por %p177, %p178
    %s181 = sadd.s32 %s180, 1
    %p184 = scmp.eq.s32.totalorder %s15, 7
    %p185 = scmp.ne.s32.totalorder %s180, %s182
    %p186 = scmp.eq.s32.totalorder %s15, 0
    %p187 = por %p185, %p186
    %p188 = scmp.ne.s32.totalorder %s180, %s182
    %p189 = scmp.eq.s32.totalorder %s20, 7
    %p190 = por %p188, %p189
    %p191 = scmp.ne.s32.totalorder %s182, %s183
    %p192 = scmp.eq.s32.totalorder %s20, 0
    %p193 = por %p191, %p192
    %p194 = scmp.ne.s32.totalorder %s182, %s183
    %p195 = scmp.eq.s32.totalorder %s21, 7
    %p196 = por %p194, %p195
    %p198 = scmp.ne.s32.totalorder %s183, %s197
    %p199 = scmp.eq.s32.totalorder %s21, 0
    %p200 = por %p198, %p199
    %s201 = ssub.s32 %s15, %s22
    %p202 = scmp.eq.s32.totalorder %s201, 0
    %s204 = sadd.s32 %s203, 1
    %s205 = scalar_select %p202, %s203, %s204
    %p208 = pneg %p202
    %p209 = scmp.eq.s32.totalorder %s15, 7
    %p210 = por %p208, %p209
    %p211 = scmp.ne.s32.totalorder %s203, %s206
    %p212 = scmp.eq.s32.totalorder %s15, 0
    %p213 = por %p211, %p212
    %p214 = scmp.ne.s32.totalorder %s203, %s206
    %p215 = scmp.eq.s32.totalorder %s20, 7
    %p216 = por %p214, %p215
    %p217 = scmp.ne.s32.totalorder %s206, %s207
    %p218 = scmp.eq.s32.totalorder %s20, 0
    %p219 = por %p217, %p218
    %p220 = scmp.ne.s32.totalorder %s206, %s207
    %p221 = scmp.eq.s32.totalorder %s21, 7
    %p222 = por %p220, %p221
    %p224 = scmp.ne.s32.totalorder %s207, %s223
    %p225 = scmp.eq.s32.totalorder %s21, 0
    %p226 = por %p224, %p225
    %p227 = scmp.le.s32.totalorder 1, %s15
    %p228 = scmp.lt.s32.totalorder %s15, 9
    %p229 = pnand %p227, %p228
    %p230 = pneg %p229
    // Predicated region
    $region9: #{tpu_custom_call.1} parent=5 // pred_check
      _
    $region10: #{tpu_custom_call.1} parent=5 // pred_check_branch
      %232 = sbr.rel (%p229) target = $region12
    $region11: #{tpu_custom_call.1} parent=5 // pred_region
      %s233 = ssub.s32 %s15, 1
      // Predicated region
      $region13: #{tpu_custom_call.1} parent=11 // pred_check
        %p234 = pneg %p88
      $region14: #{tpu_custom_call.1} parent=11 // pred_check_branch
        %236 = sbr.rel (%p234) target = $region16
      $region15: #{tpu_custom_call.1} parent=11 // pred_region
        _
      $region16: #{tpu_custom_call.1} parent=11 // pred_fallthru
        _
      // Predicated region
      $region17: #{tpu_custom_call.1} parent=11 // pred_check
        %p237 = pneg %p109
      $region18: #{tpu_custom_call.1} parent=11 // pred_check_branch
        %239 = sbr.rel (%p237) target = $region20
      $region19: #{tpu_custom_call.1} parent=11 // pred_region
        _
      $region20: #{tpu_custom_call.1} parent=11 // pred_fallthru
        _
      // Predicated region
      $region21: #{tpu_custom_call.1} parent=11 // pred_check
        %p240 = pneg %p130
      $region22: #{tpu_custom_call.1} parent=11 // pred_check_branch
        %242 = sbr.rel (%p240) target = $region24
      $region23: #{tpu_custom_call.1} parent=11 // pred_region
        _
      $region24: #{tpu_custom_call.1} parent=11 // pred_fallthru
        _
      // Predicated region
      $region25: #{tpu_custom_call.1} parent=11 // pred_check
        %p243 = pneg %p151
      $region26: #{tpu_custom_call.1} parent=11 // pred_check_branch
        %245 = sbr.rel (%p243) target = $region28
      $region27: #{tpu_custom_call.1} parent=11 // pred_region
        _
      $region28: #{tpu_custom_call.1} parent=11 // pred_fallthru
        _
      // Predicated region
      $region29: #{tpu_custom_call.1} parent=11 // pred_check
        %p246 = pneg %p172
      $region30: #{tpu_custom_call.1} parent=11 // pred_check_branch
        %248 = sbr.rel (%p246) target = $region32
      $region31: #{tpu_custom_call.1} parent=11 // pred_region
        _
      $region32: #{tpu_custom_call.1} parent=11 // pred_fallthru
        _
      // Predicated region
      $region33: #{tpu_custom_call.1} parent=11 // pred_check
        %p249 = pneg %p193
      $region34: #{tpu_custom_call.1} parent=11 // pred_check_branch
        %251 = sbr.rel (%p249) target = $region36
      $region35: #{tpu_custom_call.1} parent=11 // pred_region
        _
      $region36: #{tpu_custom_call.1} parent=11 // pred_fallthru
        _
    $region12: #{tpu_custom_call.1} parent=5 // pred_fallthru
      _
    %p252 = scmp.lt.s32.totalorder %s15, 8
    // Predicated region
    $region37: #{tpu_custom_call.1} parent=5 // pred_check
      %p253 = pneg %p252
    $region38: #{tpu_custom_call.1} parent=5 // pred_check_branch
      %255 = sbr.rel (%p253) target = $region40
    $region39: #{tpu_custom_call.1} parent=5 // pred_region
      // Predicated region
      $region41: #{tpu_custom_call.1} parent=39 // pred_check
        %p256 = pneg %p35
      $region42: #{tpu_custom_call.1} parent=39 // pred_check_branch
        %258 = sbr.rel (%p256) target = $region44
      $region43: #{tpu_custom_call.1} parent=39 // pred_region
        %s259 = smul.u32 4, %s15
        %p260 = scmp.lt.s32.totalorder %s259, 31
        %s261 = scalar_select %p260, %s259, 31
        %s262 = smul.addr %s261, 4
        %s263 = scalar_lea.vmem %s0, %s262
        %s264 = smul.u32 4, %s15
      $region44: #{tpu_custom_call.1} parent=39 // pred_fallthru
        _
      // Predicated region
      $region45: #{tpu_custom_call.1} parent=39 // pred_check
        %p265 = pneg %p61
      $region46: #{tpu_custom_call.1} parent=39 // pred_check_branch
        %267 = sbr.rel (%p265) target = $region48
      $region47: #{tpu_custom_call.1} parent=39 // pred_region
        %s268 = smul.u32 4, %s15
        %p269 = scmp.lt.s32.totalorder %s268, 31
        %s270 = scalar_select %p269, %s268, 31
        %s271 = smul.addr %s270, 4
        %s272 = scalar_lea.vmem %s1, %s271
        %s273 = smul.u32 4, %s15
      $region48: #{tpu_custom_call.1} parent=39 // pred_fallthru
        _
    $region40: #{tpu_custom_call.1} parent=5 // pred_fallthru
      _
    %p274 = scmp.le.s32.totalorder 1, %s15
    %p275 = scmp.lt.s32.totalorder %s15, 9
    %p276 = pnand %p274, %p275
    %p277 = pneg %p276
    // Predicated region
    $region49: #{tpu_custom_call.1} parent=5 // pred_check
      _
    $region50: #{tpu_custom_call.1} parent=5 // pred_check_branch
      %279 = sbr.rel (%p276) target = $region52
    $region51: #{tpu_custom_call.1} parent=5 // pred_region
      %s280 = ssub.s32 %s15, 1
      %s281 = smul.u32 4, %s20
      %p282 = scmp.lt.s32.totalorder %s281, 31
      %s283 = scalar_select %p282, %s281, 31
      %s284 = smul.addr %s283, 4
      %s285 = scalar_lea.vmem %s0, %s284
      %p286 = pneg %p41
      %p287 = pneg %p38
      %s288 = smul.u32 4, %s20
      %p289 = scmp.lt.s32.totalorder %s288, 31
      %s290 = scalar_select %p289, %s288, 31
      %s291 = smul.addr %s290, 4
      %s292 = scalar_lea.vmem %s1, %s291
      %p293 = pneg %p67
      %p294 = pneg %p64
      %p295 = pneg %p88
      %p296 = pneg %p85
      %p297 = pneg %p109
      %p298 = pneg %p106
      %p299 = pneg %p130
      %p300 = pneg %p127
      %p301 = pneg %p151
      %p302 = pneg %p148
      %p303 = pneg %p172
      %p304 = pneg %p169
      %p305 = pneg %p193
      %p306 = pneg %p190
      %p307 = pneg %p219
      %p308 = pneg %p216
      %s309 = smul.u32 4, %s20
      %p310 = scmp.lt.s32.totalorder %s309, 31
      %s311 = scalar_select %p310, %s309, 31
      %s312 = smul.addr %s311, 8
      %s313 = scalar_lea.vmem %s8, %s312
      %s314 = smul.u32 4, %s20
      %p315 = scmp.lt.s32.totalorder %s314, 31
      %s316 = scalar_select %p315, %s314, 31
      %s317 = smul.addr %s316, 4
      %s318 = scalar_lea.vmem %s0, %s317
      %s319 = smul.u32 4, %s20
      %s320 = smul.u32 4, %s20
      %p321 = scmp.lt.s32.totalorder %s320, 31
      %s322 = scalar_select %p321, %s320, 31
      %s323 = smul.addr %s322, 4
      %s324 = scalar_lea.vmem %s1, %s323
      %s325 = smul.u32 4, %s20
      %s326 = smul.u32 4, %s20
      %p327 = scmp.lt.s32.totalorder %s326, 31
      %s328 = scalar_select %p327, %s326, 31
      %s329 = smul.addr %s328, 8
      %s330 = scalar_lea.vmem %s8, %s329
      %s331 = smul.u32 4, %s20
      %v333 = vld [vmem:[%s318] sm:$0xf]
      %v334 = vld [vmem:[%s318 + $0x4] sm:$0xf]
      %v335 = vld [vmem:[%s318 + $0x8] sm:$0xf]
      %v336 = vld [vmem:[%s318 + $0xc] sm:$0xf]
      %v337 = vld [vmem:[%s2] sm:$0xf]
      %v338 = vld [vmem:[%s2 + $0x4] sm:$0xf]
      %v339 = vld [vmem:[%s2 + $0x8] sm:$0xf]
      %v340 = vld [vmem:[%s2 + $0xc] sm:$0xf]
      %v341 = vld [vmem:[%s324] sm:$0xf]
      %v342 = vld [vmem:[%s324 + $0x4] sm:$0xf]
      %v343 = vld [vmem:[%s324 + $0x8] sm:$0xf]
      %v344 = vld [vmem:[%s324 + $0xc] sm:$0xf]
      %v345 = vld [vmem:[%s3] sm:$0xf]
      %v346 = vld [vmem:[%s3 + $0x4] sm:$0xf]
      %v347 = vld [vmem:[%s3 + $0x8] sm:$0xf]
      %v348 = vld [vmem:[%s3 + $0xc] sm:$0xf]
      %v349 = vld [vmem:[%s3 + $0x10] sm:$0xf]
      %v350 = vld [vmem:[%s3 + $0x14] sm:$0xf]
      %v351 = vld [vmem:[%s3 + $0x18] sm:$0xf]
      %v352 = vld [vmem:[%s3 + $0x1c] sm:$0xf]
      %v357 = vunpack.c.l.b16 %v341
      %v358 = vunpack.c.l.b16 %v342
      %v359 = vunpack.c.l.b16 %v343
      %v360 = vunpack.c.l.b16 %v344
      %v361 = vpack.c.b16 %v358, %v357
      %v362 = vpack.c.b16 %v360, %v359
      %v371 = vunpack.c.l.b16 %v345
      %v372 = vunpack.c.l.b16 %v346
      %v373 = vunpack.c.l.b16 %v347
      %v374 = vunpack.c.l.b16 %v348
      %v375 = vunpack.c.l.b16 %v349
      %v376 = vunpack.c.l.b16 %v350
      %v377 = vunpack.c.l.b16 %v351
      %v378 = vunpack.c.l.b16 %v352
      %v379 = vpack.c.b16 %v372, %v371
      %v380 = vpack.c.b16 %v374, %v373
      %v381 = vpack.c.b16 %v376, %v375
      %v382 = vpack.c.b16 %v378, %v377
      %vm387 = vcmask 523264
      %v389 = vsel %vm387, %v361, 0
      %v392 = vsel %vm387, %v362, 0
      %394 = vmatprep.subr.bf16.mxu0 0
      %395 = vmatpush1.bf16.msra.mxu0 %v379
      %396 = vmatprep.subr.bf16.mxu0 0
      %397 = vmatpush1.bf16.msra.mxu0 %v380
      %398 = vmatprep.subr.bf16.mxu0 0
      %399 = vmatpush1.bf16.msra.mxu0 %v381
      %400 = vmatprep.subr.bf16.mxu0 0
      %401 = vmatpush1.bf16.msra.mxu0 %v382
      %402 = vmatprep.subr.bf16.mxu0 0
      %403 = vmatpush1.bf16.msra.mxu0 0
      %404 = vmatprep.subr.bf16.mxu0 0
      %405 = vmatpush1.bf16.msra.mxu0 0
      %406 = vmatprep.subr.bf16.mxu0 0
      %407 = vmatpush1.bf16.msra.mxu0 0
      %408 = vmatprep.subr.bf16.mxu0 0
      %409 = vmatpush1.bf16.msra.mxu0 0
      %410 = vmatprep.subr.bf16.mxu0 0
      %411 = vmatpush1.bf16.msra.mxu0 0
      %412 = vmatprep.subr.bf16.mxu0 0
      %413 = vmatpush1.bf16.msra.mxu0 0
      %414 = vmatprep.subr.bf16.mxu0 0
      %415 = vmatpush1.bf16.msra.mxu0 0
      %416 = vmatprep.subr.bf16.mxu0 0
      %417 = vmatpush1.bf16.msra.mxu0 0
      %418 = vmatprep.subr.bf16.mxu0 0
      %419 = vmatpush1.bf16.msra.mxu0 0
      %420 = vmatprep.subr.bf16.mxu0 0
      %421 = vmatpush1.bf16.msra.mxu0 0
      %422 = vmatprep.subr.bf16.mxu0 0
      %423 = vmatpush1.bf16.msra.mxu0 0
      %424 = vmatprep.subr.bf16.mxu0 0
      %425 = vmatpush1.bf16.msra.mxu0 0
      %426 = vmatprep.mubr.bf16.mxu0 0
      %427 = vmatmul.mubr.bf16.gmra.mrb[0].mxu0 %v389
      %v428 = vpop.f32.mrb[0].mxu0
      %v429 = vadd.f32 0.0, %v428
      %v430 = vpop.f32.mrb[0].mxu0
      %v431 = vpop.f32.mrb[0].mxu0
      %v432 = vadd.f32 0.0, %v431
      %v433 = vpop.f32.mrb[0].mxu0
      %434 = vmatprep.mubr.bf16.mxu0 0
      %435 = vmatmul.mubr.bf16.gmra.mrb[0].mxu0 %v392
      %v436 = vpop.f32.mrb[0].mxu0
      %v437 = vadd.f32 0.0, %v436
      %v438 = vpop.f32.mrb[0].mxu0
      %v439 = vpop.f32.mrb[0].mxu0
      %v440 = vadd.f32 0.0, %v439
      %v441 = vpop.f32.mrb[0].mxu0
      %442 = vdwg.mxu0
      %v447 = vunpack.c.l.b16 %v333
      %v448 = vunpack.c.l.b16 %v334
      %v449 = vunpack.c.l.b16 %v335
      %v450 = vunpack.c.l.b16 %v336
      %v451 = vpack.c.b16 %v448, %v447
      %v452 = vpack.c.b16 %v450, %v449
      %v457 = vunpack.c.l.b16 %v337
      %v458 = vunpack.c.l.b16 %v338
      %v459 = vunpack.c.l.b16 %v339
      %v460 = vunpack.c.l.b16 %v340
      %v461 = vpack.c.b16 %v458, %v457
      %v462 = vpack.c.b16 %v460, %v459
      %vm465 = vcmask 261120
      %v467 = vsel %vm465, %v451, 0
      %v470 = vsel %vm465, %v452, 0
      %472 = vmatprep.subr.bf16.mxu0 0
      %473 = vmatpush1.bf16.msra.mxu0 %v461
      %474 = vmatprep.subr.bf16.mxu0 0
      %475 = vmatpush1.bf16.msra.mxu0 %v462
      %476 = vmatprep.subr.bf16.mxu0 0
      %477 = vmatpush1.bf16.msra.mxu0 0
      %478 = vmatprep.subr.bf16.mxu0 0
      %479 = vmatpush1.bf16.msra.mxu0 0
      %480 = vmatprep.subr.bf16.mxu0 0
      %481 = vmatpush1.bf16.msra.mxu0 0
      %482 = vmatprep.subr.bf16.mxu0 0
      %483 = vmatpush1.bf16.msra.mxu0 0
      %484 = vmatprep.subr.bf16.mxu0 0
      %485 = vmatpush1.bf16.msra.mxu0 0
      %486 = vmatprep.subr.bf16.mxu0 0
      %487 = vmatpush1.bf16.msra.mxu0 0
      %488 = vmatprep.subr.bf16.mxu0 0
      %489 = vmatpush1.bf16.msra.mxu0 0
      %490 = vmatprep.subr.bf16.mxu0 0
      %491 = vmatpush1.bf16.msra.mxu0 0
      %492 = vmatprep.subr.bf16.mxu0 0
      %493 = vmatpush1.bf16.msra.mxu0 0
      %494 = vmatprep.subr.bf16.mxu0 0
      %495 = vmatpush1.bf16.msra.mxu0 0
      %496 = vmatprep.subr.bf16.mxu0 0
      %497 = vmatpush1.bf16.msra.mxu0 0
      %498 = vmatprep.subr.bf16.mxu0 0
      %499 = vmatpush1.bf16.msra.mxu0 0
      %500 = vmatprep.subr.bf16.mxu0 0
      %501 = vmatpush1.bf16.msra.mxu0 0
      %502 = vmatprep.subr.bf16.mxu0 0
      %503 = vmatpush1.bf16.msra.mxu0 0
      %504 = vmatprep.mubr.bf16.mxu0 0
      %505 = vmatmul.mubr.bf16.gmra.mrb[0].mxu0 %v467
      %v506 = vpop.f32.mrb[0].mxu0
      %v507 = vadd.f32 %v429, %v506
      %v508 = vpop.f32.mrb[0].mxu0
      %v509 = vpop.f32.mrb[0].mxu0
      %v510 = vadd.f32 %v432, %v509
      %v511 = vpop.f32.mrb[0].mxu0
      %512 = vmatprep.mubr.bf16.mxu0 0
      %513 = vmatmul.mubr.bf16.gmra.mrb[0].mxu0 %v470
      %v514 = vpop.f32.mrb[0].mxu0
      %v515 = vadd.f32 %v437, %v514
      %v516 = vpop.f32.mrb[0].mxu0
      %v517 = vpop.f32.mrb[0].mxu0
      %v518 = vadd.f32 %v440, %v517
      %v519 = vpop.f32.mrb[0].mxu0
      %520 = vdwg.mxu0
      %v521 = vld [vmem:[%s4] sm:$0x1]
      %v523 = vlaneseq
      %v524 = vshrl.u32 %v523, 7
      %v525 = vsub.s32 0, %v524
      %v526 = vrot.slane %v521, %v525
      %v528 = vadd.f32 %v507, %v526
      %v529 = vadd.f32 %v510, %v526
      %v530 = vadd.f32 %v515, %v526
      %v531 = vadd.f32 %v518, %v526
      %s532 = sld [smem:[#allocation2]]
      %vm533 = vcmp.gt.f32.partialorder %v528, 0.0
      %vm534 = vcmp.gt.f32.partialorder %v529, 0.0
      %vm535 = vcmp.gt.f32.partialorder %v530, 0.0
      %vm536 = vcmp.gt.f32.partialorder %v531, 0.0
      %v537 = vstv %s532
      %v538 = vmul.f32 %v537, %v528
      %v539 = vmul.f32 %v537, %v529
      %v540 = vmul.f32 %v537, %v530
      %v541 = vmul.f32 %v537, %v531
      %v542 = vsel %vm533, %v528, %v538
      %v543 = vsel %vm534, %v529, %v539
      %v544 = vsel %vm535, %v530, %v540
      %v545 = vsel %vm536, %v531, %v541
      %v546 = vpack.c.bf16 %v543, %v542
      %v547 = vpack.c.bf16 %v545, %v544
      %v548 = vld [vmem:[%s5] sm:$0xf]
      %v549 = vld [vmem:[%s5 + $0x4] sm:$0xf]
      %v550 = vld [vmem:[%s5 + $0x8] sm:$0xf]
      %v551 = vld [vmem:[%s5 + $0xc] sm:$0xf]
      %v552 = vld [vmem:[%s5 + $0x10] sm:$0xf]
      %v553 = vld [vmem:[%s5 + $0x14] sm:$0xf]
      %v554 = vld [vmem:[%s5 + $0x18] sm:$0xf]
      %v555 = vld [vmem:[%s5 + $0x1c] sm:$0xf]
      %v556 = vld [vmem:[%s5 + $0x20] sm:$0xf]
      %v557 = vld [vmem:[%s5 + $0x24] sm:$0xf]
      %v558 = vld [vmem:[%s5 + $0x28] sm:$0xf]
      %v559 = vld [vmem:[%s5 + $0x2c] sm:$0xf]
      %v560 = vld [vmem:[%s6] sm:$0x1]
      %v562 = vlaneseq
      %v563 = vshrl.u32 %v562, 7
      %v564 = vsub.s32 0, %v563
      %v565 = vrot.slane %v560, %v564
      %v579 = vunpack.c.l.b16 %v548
      %v580 = vunpack.c.l.b16 %v549
      %v581 = vunpack.c.l.b16 %v550
      %v582 = vunpack.c.l.b16 %v551
      %v583 = vunpack.c.l.b16 %v552
      %v584 = vunpack.c.l.b16 %v553
      %v585 = vunpack.c.l.b16 %v554
      %v586 = vunpack.c.l.b16 %v555
      %v587 = vunpack.c.l.b16 %v556
      %v588 = vunpack.c.l.b16 %v557
      %v589 = vunpack.c.l.b16 %v558
      %v590 = vunpack.c.l.b16 %v559
      %v591 = vpack.c.b16 %v580, %v579
      %v592 = vpack.c.b16 %v582, %v581
      %v593 = vpack.c.b16 %v584, %v583
      %v594 = vpack.c.b16 %v586, %v585
      %v595 = vpack.c.b16 %v588, %v587
      %v596 = vpack.c.b16 %v590, %v589
      %vm603 = vcmask 785408
      %v605 = vsel %vm603, %v546, 0
      %v608 = vsel %vm603, %v547, 0
      %610 = vmatprep.subr.bf16.mxu0 0
      %611 = vmatpush1.bf16.msra.mxu0 %v591
      %612 = vmatprep.subr.bf16.mxu0 0
      %613 = vmatpush1.bf16.msra.mxu0 %v592
      %614 = vmatprep.subr.bf16.mxu0 0
      %615 = vmatpush1.bf16.msra.mxu0 %v593
      %616 = vmatprep.subr.bf16.mxu0 0
      %617 = vmatpush1.bf16.msra.mxu0 %v594
      %618 = vmatprep.subr.bf16.mxu0 0
      %619 = vmatpush1.bf16.msra.mxu0 %v595
      %620 = vmatprep.subr.bf16.mxu0 0
      %621 = vmatpush1.bf16.msra.mxu0 %v596
      %622 = vmatprep.subr.bf16.mxu0 0
      %623 = vmatpush1.bf16.msra.mxu0 0
      %624 = vmatprep.subr.bf16.mxu0 0
      %625 = vmatpush1.bf16.msra.mxu0 0
      %626 = vmatprep.subr.bf16.mxu0 0
      %627 = vmatpush1.bf16.msra.mxu0 0
      %628 = vmatprep.subr.bf16.mxu0 0
      %629 = vmatpush1.bf16.msra.mxu0 0
      %630 = vmatprep.subr.bf16.mxu0 0
      %631 = vmatpush1.bf16.msra.mxu0 0
      %632 = vmatprep.subr.bf16.mxu0 0
      %633 = vmatpush1.bf16.msra.mxu0 0
      %634 = vmatprep.subr.bf16.mxu0 0
      %635 = vmatpush1.bf16.msra.mxu0 0
      %636 = vmatprep.subr.bf16.mxu0 0
      %637 = vmatpush1.bf16.msra.mxu0 0
      %638 = vmatprep.subr.bf16.mxu0 0
      %639 = vmatpush1.bf16.msra.mxu0 0
      %640 = vmatprep.subr.bf16.mxu0 0
      %641 = vmatpush1.bf16.msra.mxu0 0
      %642 = vmatprep.mubr.bf16.mxu0 0
      %643 = vmatmul.mubr.bf16.gmra.mrb[0].mxu0 %v605
      %v644 = vpop.f32.mrb[0].mxu0
      %v645 = vadd.f32 %v565, %v644
      %v646 = vpop.f32.mrb[0].mxu0
      %v647 = vpop.f32.mrb[0].mxu0
      %v648 = vadd.f32 %v565, %v647
      %v649 = vpop.f32.mrb[0].mxu0
      %650 = vmatprep.mubr.bf16.mxu0 0
      %651 = vmatmul.mubr.bf16.gmra.mrb[0].mxu0 %v608
      %v652 = vpop.f32.mrb[0].mxu0
      %v653 = vadd.f32 %v565, %v652
      %v654 = vpop.f32.mrb[0].mxu0
      %v655 = vpop.f32.mrb[0].mxu0
      %v656 = vadd.f32 %v565, %v655
      %v657 = vpop.f32.mrb[0].mxu0
      %658 = vdwg.mxu0
      %vm659 = vcmask 130048
      %660 = vst.msk [vmem:[%s330] sm:$0xff] %vm659, %v645
      %661 = vst.msk [vmem:[%s330 + $0x8] sm:$0xff] %vm659, %v648
      %662 = vst.msk [vmem:[%s330 + $0x10] sm:$0xff] %vm659, %v653
      %663 = vst.msk [vmem:[%s330 + $0x18] sm:$0xff] %vm659, %v656
      %s664 = smul.u32 4, %s20
      %p665 = scmp.lt.s32.totalorder %s664, 31
      %s666 = scalar_select %p665, %s664, 31
      %s667 = smul.addr %s666, 8
      %s668 = scalar_lea.vmem %s8, %s667
      // Predicated region
      $region53: #{tpu_custom_call.1} parent=51 // pred_check
        %p669 = pneg %p216
      $region54: #{tpu_custom_call.1} parent=51 // pred_check_branch
        %671 = sbr.rel (%p669) target = $region56
      $region55: #{tpu_custom_call.1} parent=51 // pred_region
        %s672 = smul.u32 4, %s20
      $region56: #{tpu_custom_call.1} parent=51 // pred_fallthru
        _
    $region52: #{tpu_custom_call.1} parent=5 // pred_fallthru
      _
    %p673 = scmp.le.s32.totalorder 2, %s15
    // Predicated region
    $region57: #{tpu_custom_call.1} parent=5 // pred_check
      %p674 = pneg %p673
    $region58: #{tpu_custom_call.1} parent=5 // pred_check_branch
      %676 = sbr.rel (%p674) target = $region60
    $region59: #{tpu_custom_call.1} parent=5 // pred_region
      %s677 = ssub.s32 %s15, 2
      // Predicated region
      $region61: #{tpu_custom_call.1} parent=59 // pred_check
        %p678 = pneg %p222
      $region62: #{tpu_custom_call.1} parent=59 // pred_check_branch
        %680 = sbr.rel (%p678) target = $region64
      $region63: #{tpu_custom_call.1} parent=59 // pred_region
        %s681 = smul.u32 4, %s21
        %p682 = scmp.lt.s32.totalorder %s681, 31
        %s683 = scalar_select %p682, %s681, 31
        %s684 = smul.addr %s683, 8
        %s685 = scalar_lea.vmem %s8, %s684
      $region64: #{tpu_custom_call.1} parent=59 // pred_fallthru
        _
    $region60: #{tpu_custom_call.1} parent=5 // pred_fallthru
      _
  $region6: #{tpu_custom_call.1} parent=0 // loop_footer
    %s19 = sadd.s32 1, %s15
  $region7: #{tpu_custom_call.1} parent=0 // loop_footer_branch
    %14 = sbr.rel target = $region3
  $region8: #{tpu_custom_call.1} parent=0 // loop_exit
    _

</llo_original>
